<compile_context>
chip_gen: v5e
topology: v5e:2x2
jax: 0.10.0
libtpu: 0.0.40
codegen_flags: <defaults>
</compile_context>

<pallas_src>
import functools

import jax
import jax.numpy as jnp
from jax import lax
from jax.experimental import pallas as pl
from jax.experimental.pallas import tpu as pltpu

_EPS = 1e-12


def _round_up(x, m):
    return ((x + m - 1) // m) * m


def _contrastive_kernel(im_ref, st_ref, dcol_ref, drow_ref, *refs,
                        margin, max_violation, n_valid, tile_m, tile_n):
    """One (tile_m, tile_n) block of the pairwise-cost computation."""
    if max_violation:
        sum_ref, colmax_ref, acc_ref = refs
    else:
        sum_ref, acc_ref = refs
        colmax_ref = None

    i = pl.program_id(0)
    j = pl.program_id(1)
    last_j = pl.num_programs(1) - 1

    @pl.when(j == 0)
    def _():
        acc_ref[...] = jnp.zeros_like(acc_ref)

    # (tile_m, tile_n) block of the score matrix on the MXU, f32 accumulation.
    scores = jnp.dot(im_ref[...], st_ref[...],
                     preferred_element_type=jnp.float32)
    base = scores + margin
    cost_s = jnp.maximum(base - dcol_ref[...], 0.0)    # image -> caption hinge
    cost_im = jnp.maximum(base - drow_ref[...], 0.0)   # caption -> image hinge

    # Mask the diagonal and any padded rows/columns explicitly (works for any
    # MXU dtype; no analytic diagonal correction needed).
    row_ids = lax.broadcasted_iota(jnp.int32, (tile_m, tile_n), 0) + i * tile_m
    col_ids = lax.broadcasted_iota(jnp.int32, (tile_m, tile_n), 1) + j * tile_n
    keep = (row_ids != col_ids) & (row_ids < n_valid) & (col_ids < n_valid)
    cost_s = jnp.where(keep, cost_s, 0.0)
    cost_im = jnp.where(keep, cost_im, 0.0)

    if max_violation:
        # Running per-row max of cost_s across column tiles.
        acc_ref[...] = jnp.maximum(acc_ref[...],
                                   jnp.max(cost_s, axis=1, keepdims=True))
        # Per-(i, j) column max of cost_im; combined across row tiles outside.
        colmax_ref[...] = jnp.reshape(jnp.max(cost_im, axis=0, keepdims=True),
                                      (1, 1, tile_n))
    else:
        acc_ref[...] += jnp.sum(cost_s + cost_im, axis=1, keepdims=True)

    @pl.when(j == last_j)
    def _():
        sum_ref[...] = jnp.reshape(jnp.sum(acc_ref[...]), (1, 1, 1))


def contrastive_loss(im, s, *, margin=0.0, max_violation=False,
                     measure="cosine", tile_rows=256, tile_cols=1024,
                     mxu_dtype=jnp.bfloat16):
    """ContrastiveLoss.forward(im, s) for measure in {'cosine', 'dot'}."""
    assert im.ndim == 2 and s.ndim == 2 and im.shape == s.shape
    n, d = im.shape
    if measure == "cosine":
        normalize = True
    elif measure == "dot":
        normalize = False
    else:
        # TODO(synk): order_sim ('order' measure) uses a different pairwise
        # score (clamped difference norm) and is not implemented here.
        raise NotImplementedError("measure must be 'cosine' or 'dot'")

    f32 = jnp.float32
    im_n = im.astype(f32)
    s_n = s.astype(f32)
    if normalize:
        def _l2n(x):
            ss = jnp.sum(x * x, axis=-1, keepdims=True)
            return x * lax.rsqrt(jnp.maximum(ss, _EPS))
        im_n, s_n = _l2n(im_n), _l2n(s_n)
    # Matching-pair scores (the diagonal), computed once in f32.
    diag = jnp.sum(im_n * s_n, axis=-1)                          # (n,)

    # --- tile sizes (generation-aware defaults; clamped to the problem) ---
    tile_m = min(_round_up(int(tile_rows), 8), _round_up(n, 8))
    if _round_up(n, tile_m) // tile_m < 2 and n > 8:
        # Ensure >= 2 row tiles so the 'parallel' axis feeds both v7x cores.
        tile_m = _round_up((n + 1) // 2, 8)
    tile_n = min(_round_up(int(tile_cols), 128), _round_up(n, 128))
    n_pad_r = _round_up(n, tile_m)
    n_pad_c = _round_up(n, tile_n)
    d_pad = _round_up(d, 128)
    num_i = n_pad_r // tile_m
    num_j = n_pad_c // tile_n

    # --- padded, pre-transposed operands (grid-invariant work hoisted) ----
    im_p = jnp.pad(im_n, ((0, n_pad_r - n), (0, d_pad - d))).astype(mxu_dtype)
    st_p = jnp.pad(s_n.T, ((0, d_pad - d), (0, n_pad_c - n))).astype(mxu_dtype)
    dcol = jnp.pad(diag, (0, n_pad_r - n)).reshape(n_pad_r, 1)
    drow = jnp.pad(diag, (0, n_pad_c - n)).reshape(1, n_pad_c)

    kernel = functools.partial(
        _contrastive_kernel, margin=float(margin),
        max_violation=bool(max_violation), n_valid=n,
        tile_m=tile_m, tile_n=tile_n)

    in_specs = [
        pl.BlockSpec((tile_m, d_pad), lambda i, j: (i, 0)),   # im row band
        pl.BlockSpec((d_pad, tile_n), lambda i, j: (0, j)),   # s^T col panel
        pl.BlockSpec((tile_m, 1), lambda i, j: (i, 0)),       # diag (col form)
        pl.BlockSpec((1, tile_n), lambda i, j: (0, j)),       # diag (row form)
    ]
    out_shape = [jax.ShapeDtypeStruct((num_i, 1, 1), f32)]
    out_specs = [pl.BlockSpec((1, 1, 1), lambda i, j: (i, 0, 0))]
    if max_violation:
        out_shape.append(jax.ShapeDtypeStruct((num_i, 1, n_pad_c), f32))
        out_specs.append(pl.BlockSpec((1, 1, tile_n), lambda i, j: (i, 0, j)))

    # VMEM budget from actual block shapes, x2 for double buffering, plus the
    # (tile_m, tile_n) f32 temporaries; capped at 48 MiB for v7x (64 MiB phys).
    itemsize = jnp.dtype(mxu_dtype).itemsize
    in_bytes = 2 * ((tile_m * d_pad + d_pad * tile_n) * itemsize
                    + (tile_m + tile_n) * 4)
    out_bytes = 2 * (4 + tile_n * 4)
    tmp_bytes = 8 * tile_m * tile_n * 4 + tile_m * 4
    vmem_limit = int(min(48 * 2**20,
                         max(24 * 2**20,
                             in_bytes + out_bytes + tmp_bytes + (8 << 20))))

    outs = pl.pallas_call(
        kernel,
        grid=(num_i, num_j),
        in_specs=in_specs,
        out_specs=out_specs,
        out_shape=out_shape,
        scratch_shapes=[pltpu.VMEM((tile_m, 1), f32)],
        compiler_params=pltpu.CompilerParams(
            dimension_semantics=("parallel", "arbitrary"),
            vmem_limit_bytes=vmem_limit),
    )(im_p, st_p, dcol, drow)

    if max_violation:
        band_sums, colmax = outs
        return jnp.sum(band_sums) + jnp.sum(jnp.max(colmax, axis=0))
    (band_sums,) = outs
    return jnp.sum(band_sums)


def _reference_loss(im, s, margin=0.0, max_violation=False, measure="cosine"):
    """Pure-JAX reference mirroring the PyTorch module."""
    if measure == "cosine":
        im = im / jnp.linalg.norm(im, axis=-1, keepdims=True)
        s = s / jnp.linalg.norm(s, axis=-1, keepdims=True)
    scores = im @ s.T
    diag = jnp.diag(scores)[:, None]
    cost_s = jnp.maximum(margin + scores - diag, 0.0)
    cost_im = jnp.maximum(margin + scores - diag.T, 0.0)
    eye = jnp.eye(scores.shape[0], dtype=bool)
    cost_s = jnp.where(eye, 0.0, cost_s)
    cost_im = jnp.where(eye, 0.0, cost_im)
    if max_violation:
        return jnp.sum(jnp.max(cost_s, axis=1)) + jnp.sum(jnp.max(cost_im, axis=0))
    return jnp.sum(cost_s) + jnp.sum(cost_im)


if __name__ == "__main__":
    key = jax.random.PRNGKey(0)
    cases = [
        dict(n=8, d=32, tile_rows=256, tile_cols=1024),    # single tile
        dict(n=12, d=40, tile_rows=256, tile_cols=1024),   # padding + 2 row tiles
        dict(n=32, d=64, tile_rows=8, tile_cols=128),      # multi row-tile grid
        dict(n=300, d=200, tile_rows=256, tile_cols=256),  # 2x2 grid, j-axis accumulation
    ]
    im = s = None
    for c in cases:
        key, k_im, k_s = jax.random.split(key, 3)
        im = jax.random.normal(k_im, (c["n"], c["d"]), dtype=jnp.float32)
        s = jax.random.normal(k_s, (c["n"], c["d"]), dtype=jnp.float32)
        for measure in ("cosine", "dot"):
            for mv in (False, True):
                got = contrastive_loss(im, s, margin=0.2, max_violation=mv,
                                       measure=measure,
                                       tile_rows=c["tile_rows"],
                                       tile_cols=c["tile_cols"],
                                       mxu_dtype=jnp.float32)
                jax.block_until_ready(got)
                want = _reference_loss(im, s, margin=0.2, max_violation=mv,
                                       measure=measure)
                assert jnp.allclose(got, want, rtol=1e-4, atol=1e-2), (
                    c, measure, mv, float(got), float(want))
    # Default bf16 MXU path (f32 accumulation) — looser tolerance sanity check.
    got = contrastive_loss(im, s, margin=0.2, max_violation=False,
                           measure="cosine", tile_rows=256, tile_cols=256)
    jax.block_until_ready(got)
    want = _reference_loss(im, s, margin=0.2, max_violation=False,
                           measure="cosine")
    assert jnp.allclose(got, want, rtol=3e-2), (float(got), float(want))
    print("KERNEL_OK")
</pallas_src>

<mosaic_0001>
module attributes {stable_mosaic.version = 11 : i64} {
  func.func @_contrastive_kernel(%arg0: i32, %arg1: i32, %arg2: memref<8x128xf32, #tpu.memory_space<vmem>>, %arg3: memref<128x128xf32, #tpu.memory_space<vmem>>, %arg4: memref<8x1xf32, #tpu.memory_space<vmem>>, %arg5: memref<1x128xf32, #tpu.memory_space<vmem>>, %arg6: memref<1x1x1xf32, #tpu.memory_space<vmem>>, %arg7: memref<8x1xf32, #tpu.memory_space<vmem>>) attributes {dimension_semantics = [#tpu.dimension_semantics<parallel>, #tpu.dimension_semantics<arbitrary>], iteration_bounds = array<i64: 1, 1>, scalar_prefetch = 0 : i64, scratch_operands = 1 : i64, tpu.core_type = #tpu.core_type<tc>, window_params = [{transform_indices = @transform_0, window_bounds = array<i64: 8, 128>}, {transform_indices = @transform_1, window_bounds = array<i64: 128, 128>}, {transform_indices = @transform_2, window_bounds = array<i64: 8, 1>}, {transform_indices = @transform_3, window_bounds = array<i64: 1, 128>}, {transform_indices = @transform_4, window_bounds = array<i64: 1, 1, 1>}]} {
    %c0_i32 = arith.constant 0 : i32
    %0 = arith.cmpi eq, %arg1, %c0_i32 : i32
    %1 = arith.extui %0 : i1 to i32
    %c0_i32_0 = arith.constant 0 : i32
    %2 = arith.cmpi ne, %1, %c0_i32_0 : i32
    scf.if %2 {
      %cst_22 = arith.constant 0.000000e+00 : f32
      %46 = vector.broadcast %cst_22 : f32 to vector<8x1xf32>
      %c0_23 = arith.constant 0 : index
      %c0_24 = arith.constant 0 : index
      %47 = vector.load %arg7[%c0_23, %c0_24] : memref<8x1xf32, #tpu.memory_space<vmem>>, vector<8x1xf32>
      tpu.vector_store %arg7[%c0_23, %c0_24], %46 {strides = array<i32>} : memref<8x1xf32, #tpu.memory_space<vmem>>, vector<8x1xf32>,
    } else {
    }
    %c0 = arith.constant 0 : index
    %c0_1 = arith.constant 0 : index
    %3 = vector.load %arg2[%c0, %c0_1] : memref<8x128xf32, #tpu.memory_space<vmem>>, vector<8x128xf32>
    %c0_2 = arith.constant 0 : index
    %c0_3 = arith.constant 0 : index
    %4 = vector.load %arg3[%c0_2, %c0_3] : memref<128x128xf32, #tpu.memory_space<vmem>>, vector<128x128xf32>
    %cst = arith.constant dense<0.000000e+00> : vector<8x128xf32>
    %5 = tpu.matmul %3, %4, %cst {dimension_numbers = #tpu.dot_dimension_numbers<[1], [0], [0], [1], [0, 0, 1, 1], [], []>} : vector<8x128xf32>, vector<128x128xf32>, vector<8x128xf32> -> vector<8x128xf32>
    %cst_4 = arith.constant 2.000000e-01 : f32
    %6 = vector.broadcast %cst_4 : f32 to vector<8x128xf32>
    %7 = arith.addf %5, %6 : vector<8x128xf32>
    %c0_5 = arith.constant 0 : index
    %c0_6 = arith.constant 0 : index
    %8 = vector.load %arg4[%c0_5, %c0_6] : memref<8x1xf32, #tpu.memory_space<vmem>>, vector<8x1xf32>
    %9 = vector.broadcast %8 : vector<8x1xf32> to vector<8x128xf32>
    %10 = arith.subf %7, %9 : vector<8x128xf32>
    %cst_7 = arith.constant 0.000000e+00 : f32
    %11 = vector.broadcast %cst_7 : f32 to vector<8x128xf32>
    %12 = arith.maximumf %10, %11 : vector<8x128xf32>
    %c0_8 = arith.constant 0 : index
    %c0_9 = arith.constant 0 : index
    %13 = vector.load %arg5[%c0_8, %c0_9] : memref<1x128xf32, #tpu.memory_space<vmem>>, vector<1x128xf32>
    %14 = vector.broadcast %13 : vector<1x128xf32> to vector<8x128xf32>
    %15 = arith.subf %7, %14 : vector<8x128xf32>
    %cst_10 = arith.constant 0.000000e+00 : f32
    %16 = vector.broadcast %cst_10 : f32 to vector<8x128xf32>
    %17 = arith.maximumf %15, %16 : vector<8x128xf32>
    %18 = tpu.iota {dimensions = array<i32: 0>} : vector<8x128xi32>
    %c8_i32 = arith.constant 8 : i32
    %19 = arith.muli %arg0, %c8_i32 : i32
    %20 = vector.broadcast %19 : i32 to vector<8x128xi32>
    %21 = arith.addi %18, %20 : vector<8x128xi32>
    %22 = tpu.iota {dimensions = array<i32: 1>} : vector<8x128xi32>
    %c128_i32 = arith.constant 128 : i32
    %23 = arith.muli %arg1, %c128_i32 : i32
    %24 = vector.broadcast %23 : i32 to vector<8x128xi32>
    %25 = arith.addi %22, %24 : vector<8x128xi32>
    %26 = arith.cmpi ne, %21, %25 : vector<8x128xi32>
    %c8_i32_11 = arith.constant 8 : i32
    %27 = vector.broadcast %c8_i32_11 : i32 to vector<8x128xi32>
    %28 = arith.cmpi slt, %21, %27 : vector<8x128xi32>
    %29 = arith.andi %26, %28 : vector<8x128xi1>
    %c8_i32_12 = arith.constant 8 : i32
    %30 = vector.broadcast %c8_i32_12 : i32 to vector<8x128xi32>
    %31 = arith.cmpi slt, %25, %30 : vector<8x128xi32>
    %32 = arith.andi %29, %31 : vector<8x128xi1>
    %cst_13 = arith.constant 0.000000e+00 : f32
    %33 = vector.broadcast %cst_13 : f32 to vector<8x128xf32>
    %34 = arith.select %32, %12, %33 : vector<8x128xi1>, vector<8x128xf32>
    %cst_14 = arith.constant 0.000000e+00 : f32
    %35 = vector.broadcast %cst_14 : f32 to vector<8x128xf32>
    %36 = arith.select %32, %17, %35 : vector<8x128xi1>, vector<8x128xf32>
    %c0_15 = arith.constant 0 : index
    %c0_16 = arith.constant 0 : index
    %37 = vector.load %arg7[%c0_15, %c0_16] : memref<8x1xf32, #tpu.memory_space<vmem>>, vector<8x1xf32>
    %38 = arith.addf %34, %36 : vector<8x128xf32>
    %cst_17 = arith.constant dense<0.000000e+00> : vector<8xf32>
    %39 = vector.multi_reduction <add>, %38, %cst_17 [1] : vector<8x128xf32> to vector<8xf32>
    %40 = vector.shape_cast %39 : vector<8xf32> to vector<8x1xf32>
    %41 = arith.addf %37, %40 : vector<8x1xf32>
    %c0_18 = arith.constant 0 : index
    %c0_19 = arith.constant 0 : index
    %42 = vector.load %arg7[%c0_18, %c0_19] : memref<8x1xf32, #tpu.memory_space<vmem>>, vector<8x1xf32>
    tpu.vector_store %arg7[%c0_18, %c0_19], %41 {strides = array<i32>} : memref<8x1xf32, #tpu.memory_space<vmem>>, vector<8x1xf32>,
    %c0_i32_20 = arith.constant 0 : i32
    %43 = arith.cmpi eq, %arg1, %c0_i32_20 : i32
    %44 = arith.extui %43 : i1 to i32
    %c0_i32_21 = arith.constant 0 : i32
    %45 = arith.cmpi ne, %44, %c0_i32_21 : i32
    scf.if %45 {
      %c0_22 = arith.constant 0 : index
      %c0_23 = arith.constant 0 : index
      %46 = vector.load %arg7[%c0_22, %c0_23] : memref<8x1xf32, #tpu.memory_space<vmem>>, vector<8x1xf32>
      %47 = vector.shape_cast %46 : vector<8x1xf32> to vector<1x8x1xf32>
      %cst_24 = arith.constant dense<0.000000e+00> : vector<1xf32>
      %48 = vector.multi_reduction <add>, %47, %cst_24 [1, 2] : vector<1x8x1xf32> to vector<1xf32>
      %49 = vector.shape_cast %48 : vector<1xf32> to vector<1x1x1xf32>
      %50 = vector.extract %49[0, 0, 0] : f32 from vector<1x1x1xf32>
      %51 = vector.broadcast %50 : f32 to vector<1x1x1xf32>
      %c0_25 = arith.constant 0 : index
      %c0_26 = arith.constant 0 : index
      %c0_27 = arith.constant 0 : index
      %52 = vector.load %arg6[%c0_25, %c0_26, %c0_27] : memref<1x1x1xf32, #tpu.memory_space<vmem>>, vector<1x1x1xf32>
      tpu.vector_store %arg6[%c0_25, %c0_26, %c0_27], %51 {strides = array<i32>} : memref<1x1x1xf32, #tpu.memory_space<vmem>>, vector<1x1x1xf32>,
    } else {
    }
    return
  }
  func.func @transform_0(%arg0: i32, %arg1: i32) -> (i32, i32) {
    %c0_i32 = arith.constant 0 : i32
    %c0_i32_0 = arith.constant 0 : i32
    return %arg0, %c0_i32 : i32, i32
  }
  func.func @transform_1(%arg0: i32, %arg1: i32) -> (i32, i32) {
    %c0_i32 = arith.constant 0 : i32
    %c0_i32_0 = arith.constant 0 : i32
    return %c0_i32, %arg1 : i32, i32
  }
  func.func @transform_2(%arg0: i32, %arg1: i32) -> (i32, i32) {
    %c0_i32 = arith.constant 0 : i32
    %c0_i32_0 = arith.constant 0 : i32
    return %arg0, %c0_i32 : i32, i32
  }
  func.func @transform_3(%arg0: i32, %arg1: i32) -> (i32, i32) {
    %c0_i32 = arith.constant 0 : i32
    %c0_i32_0 = arith.constant 0 : i32
    return %c0_i32, %arg1 : i32, i32
  }
  func.func @transform_4(%arg0: i32, %arg1: i32) -> (i32, i32, i32) {
    %c0_i32 = arith.constant 0 : i32
    %c0_i32_0 = arith.constant 0 : i32
    %c0_i32_1 = arith.constant 0 : i32
    return %arg0, %c0_i32, %c0_i32_0 : i32, i32, i32
  }
}

</mosaic_0001>

<llo_original>
// kernel: tpu_custom_call.1
$region0: #{tpu_custom_call.1}
  #allocation0 [shape = 'u32[]', space=smem, size = 0x4, offset = 0x4, fixed_abs, tag = 'smem constant byte address 0x4 - core index']
  #allocation1 [shape = 'u32[72,128]{1,0:T(1,128)}', space=vmem, size = 0x9000, scoped, tag = 'internal scratch']
  #allocation2 [shape = 'f32[8,1]{1,0:T(8,128)}', space=vmem, size = 0x1000, scoped, tag = 'scratch operand']
  %s0 = inlined_call_operand.vmem [shape: f32[8,128], index: 0, kind: input, shape index: {}]
  %s1 = inlined_call_operand.hbm [shape: f32[128,128], index: 1, kind: input, shape index: {}]
  %s2 = inlined_call_operand.vmem [shape: f32[8,1], index: 2, kind: input, shape index: {}]
  %s3 = inlined_call_operand.vmem [shape: f32[1,128], index: 3, kind: input, shape index: {}]
  %s4 = inlined_call_operand.hbm [shape: f32[1,1,1], index: 4, kind: output, shape index: {}]
  %s5 = sld [smem:[#allocation0]]
  $region38: #{tpu_custom_call.1} parent=0
    _
  %s7 = ssub.s32 1, %s5
  %s8 = scalar_select 0, %s7, %s5
  $region1: #{tpu_custom_call.1} parent=0
    #allocation3 [shape = 'u8[65536]{0}', space=vmem, size = 0x10000, scoped, tag = 'input window, operand 1, single buffered']
    #allocation4 [shape = 's32[1]{0}', space=sflag, size = 0x4, scoped, tag = 'scoped memory for tpu_custom_call.1']
    #allocation5 [shape = 's32[1]{0}', space=sflag, size = 0x4, scoped, tag = 'scoped memory for tpu_custom_call.1']
    #allocation6 [shape = 'u8[512]{0}', space=vmem, size = 0x400, scoped, tag = 'output window, operand 0, single buffered']
    %9 = vsyncpa [#allocation4], 0
    %10 = vsyncpa [#allocation5], 0
    // Predicated region
    $region2: #{tpu_custom_call.1} parent=1 // pred_check
      _
    $region3: #{tpu_custom_call.1} parent=1 // pred_check_branch
      %12 = sbr.rel (0) target = $region5
    $region4: #{tpu_custom_call.1} parent=1 // pred_region
      _
    $region5: #{tpu_custom_call.1} parent=1 // pred_fallthru
      _
    // Predicated region
    $region6: #{tpu_custom_call.1} parent=1 // pred_check
      _
    $region7: #{tpu_custom_call.1} parent=1 // pred_check_branch
      %14 = sbr.rel (0) target = $region9
    $region8: #{tpu_custom_call.1} parent=1 // pred_region
      %16 = vsyncadd [#allocation4], 0
      %s17 = sshll.u32 %s1, 4
      %s18 = int_to_ptr.hbm [resolvable:$true] %s17
      %s19 = sshll.u32 [#allocation3], 4
      %s20 = int_to_ptr.vmem [resolvable:$true] %s19
      %25 = dma.hbm_to_vmem [thread:$0]  %s18, 2048, %s20, [#allocation4], 128, 128, 8
    $region9: #{tpu_custom_call.1} parent=1 // pred_fallthru
      _
    // Predicated region
    $region10: #{tpu_custom_call.1} parent=1 // pred_check
      _
    $region11: #{tpu_custom_call.1} parent=1 // pred_check_branch
      %27 = sbr.rel (0) target = $region13
    $region12: #{tpu_custom_call.1} parent=1 // pred_region
      _
    $region13: #{tpu_custom_call.1} parent=1 // pred_fallthru
      _
    // Predicated region
    $region14: #{tpu_custom_call.1} parent=1 // pred_check
      _
    $region15: #{tpu_custom_call.1} parent=1 // pred_check_branch
      %29 = sbr.rel (0) target = $region17
    $region16: #{tpu_custom_call.1} parent=1 // pred_region
      _
    $region17: #{tpu_custom_call.1} parent=1 // pred_fallthru
      _
    // Predicated region
    $region18: #{tpu_custom_call.1} parent=1 // pred_check
      _
    $region19: #{tpu_custom_call.1} parent=1 // pred_check_branch
      %31 = sbr.rel (0) target = $region21
    $region20: #{tpu_custom_call.1} parent=1 // pred_region
      %33 = dma.done [#allocation4], 2048
    $region21: #{tpu_custom_call.1} parent=1 // pred_fallthru
      _
    %p34 = scmp.eq.s32.totalorder 0, 0
    // Predicated region
    $region22: #{tpu_custom_call.1} parent=1 // pred_check
      %p35 = pneg %p34
    $region23: #{tpu_custom_call.1} parent=1 // pred_check_branch
      %37 = sbr.rel (%p35) target = $region25
    $region24: #{tpu_custom_call.1} parent=1 // pred_region
      %vm38 = vcmask 7168
      %39 = vst.msk [vmem:[#allocation2] sm:$0xff] %vm38, 0.0
    $region25: #{tpu_custom_call.1} parent=1 // pred_fallthru
      _
    %v40 = vld [vmem:[%s0] sm:$0xff]
    %v41 = vld [vmem:[#allocation3] sm:$0xff]
    %v42 = vld [vmem:[#allocation3 + $0x8] sm:$0xff]
    %v43 = vld [vmem:[#allocation3 + $0x10] sm:$0xff]
    %v44 = vld [vmem:[#allocation3 + $0x18] sm:$0xff]
    %v45 = vld [vmem:[#allocation3 + $0x20] sm:$0xff]
    %v46 = vld [vmem:[#allocation3 + $0x28] sm:$0xff]
    %v47 = vld [vmem:[#allocation3 + $0x30] sm:$0xff]
    %v48 = vld [vmem:[#allocation3 + $0x38] sm:$0xff]
    %v49 = vld [vmem:[#allocation3 + $0x40] sm:$0xff]
    %v50 = vld [vmem:[#allocation3 + $0x48] sm:$0xff]
    %v51 = vld [vmem:[#allocation3 + $0x50] sm:$0xff]
    %v52 = vld [vmem:[#allocation3 + $0x58] sm:$0xff]
    %v53 = vld [vmem:[#allocation3 + $0x60] sm:$0xff]
    %v54 = vld [vmem:[#allocation3 + $0x68] sm:$0xff]
    %v55 = vld [vmem:[#allocation3 + $0x70] sm:$0xff]
    %v56 = vld [vmem:[#allocation3 + $0x78] sm:$0xff]
    %57 = vmatpush.msra.mxu0 %v56
    %58 = vmatpush.msra.mxu0 %v55
    %59 = vmatpush.msra.mxu0 %v54
    %60 = vmatpush.msra.mxu0 %v53
    %61 = vmatpush.msra.mxu0 %v52
    %62 = vmatpush.msra.mxu0 %v51
    %63 = vmatpush.msra.mxu0 %v50
    %64 = vmatpush.msra.mxu0 %v49
    %65 = vmatpush.msra.mxu0 %v48
    %66 = vmatpush.msra.mxu0 %v47
    %67 = vmatpush.msra.mxu0 %v46
    %68 = vmatpush.msra.mxu0 %v45
    %69 = vmatpush.msra.mxu0 %v44
    %70 = vmatpush.msra.mxu0 %v43
    %71 = vmatpush.msra.mxu0 %v42
    %72 = vmatpush.msra.mxu0 %v41
    %73 = vmatmul.f32.gmra.mxu0 %v40
    %v74 = vpop.f32.mrf.mxu0
    %v75 = vadd.f32 0.2, %v74
    %76 = vdwg.mxu0
    %v77 = vld [vmem:[%s2] sm:$0xff]
    %79 = vset.pattern.permute.xlu0 0
    %80 = vperm.xlu0 %79, %v77
    %v81 = vpop.permute.xlu0 %80
    %v83 = vsub.f32 %v75, %v81
    %v84 = vmax.f32 %v83, 0.0
    %v85 = vld [vmem:[%s3] sm:$0x1]
    %v87 = vperm.slane %v85, 0
    %v89 = vsub.f32 %v75, %v87
    %v90 = vmax.f32 %v89, 0.0
    %v91 = vlaneseq
    %v92 = vshrl.u32 %v91, 7
    %s93 = smul.u32 0, 8
    %v94 = vstv %s93
    %v95 = vadd.s32 %v92, %v94
    %v96 = vlaneseq
    %v97 = vand.u32 %v96, 127
    %s98 = smul.u32 0, 128
    %v99 = vstv %s98
    %v100 = vadd.s32 %v97, %v99
    %vm101 = vcmp.ne.s32.totalorder %v95, %v100
    %vm102 = vcmp.lt.s32.totalorder %v95, 8
    %vm103 = vmand %vm101, %vm102
    %vm104 = vcmp.lt.s32.totalorder %v100, 8
    %vm105 = vmand %vm103, %vm104
    %v106 = vsel %vm105, %v84, 0.0
    %v107 = vsel %vm105, %v90, 0.0
    %v108 = vld [vmem:[#allocation2] sm:$0xff]
    %v109 = vadd.f32 %v106, %v107
    %110 = vadd.xlane.f32.xlu0 %v109
    %v111 = vpop.xlane.xlu0 %110
    %v112 = vadd.f32 %v108, %v111
    %vm113 = vcmask 7168
    %114 = vst.msk [vmem:[#allocation2] sm:$0xff] %vm113, %v112
    // Predicated region
    $region26: #{tpu_custom_call.1} parent=1 // pred_check
      %p115 = pneg %p34
    $region27: #{tpu_custom_call.1} parent=1 // pred_check_branch
      %117 = sbr.rel (%p115) target = $region29
    $region28: #{tpu_custom_call.1} parent=1 // pred_region
      %v118 = vld [vmem:[#allocation2] sm:$0xff]
      %v119 = vsel %vm113, %v118, 0.0
      %120 = vadd.xlane.f32.xlu0 %v119
      %v121 = vpop.xlane.xlu0 %120
      %v122 = vrot.slane %v121, 4
      %v123 = vadd.f32 %v121, %v122
      %v124 = vrot.slane %v123, 2
      %v125 = vadd.f32 %v123, %v124
      %v126 = vrot.slane %v125, 1
      %v127 = vadd.f32 %v125, %v126
      %s128 = vtos %v127
      %v129 = vstv %s128
      %vm130 = vcmask 0
      %131 = vst.msk [vmem:[#allocation6] sm:$0x1] %vm130, %v129
    $region29: #{tpu_custom_call.1} parent=1 // pred_fallthru
      _
    // Predicated region
    $region30: #{tpu_custom_call.1} parent=1 // pred_check
      _
    $region31: #{tpu_custom_call.1} parent=1 // pred_check_branch
      %133 = sbr.rel (0) target = $region33
    $region32: #{tpu_custom_call.1} parent=1 // pred_region
      %135 = vsyncadd [#allocation5], 0
      %s137 = sshll.u32 [#allocation6], 4
      %s138 = int_to_ptr.vmem [resolvable:$true] %s137
      %s139 = sshll.u32 %s4, 4
      %s140 = int_to_ptr.hbm [resolvable:$true] %s139
      %142 = dma.vmem_to_hbm [thread:$0]  %s138, 16, %s140, [#allocation5]
    $region33: #{tpu_custom_call.1} parent=1 // pred_fallthru
      _
    // Predicated region
    $region34: #{tpu_custom_call.1} parent=1 // pred_check
      _
    $region35: #{tpu_custom_call.1} parent=1 // pred_check_branch
      %144 = sbr.rel (0) target = $region37
    $region36: #{tpu_custom_call.1} parent=1 // pred_region
      %146 = dma.done [#allocation5], 16
    $region37: #{tpu_custom_call.1} parent=1 // pred_fallthru
      _
    %147 = vsyncpa [#allocation4], 1
    %148 = vsyncpa [#allocation5], 1

</llo_original>
